<compile_context>
chip_gen: v7x
topology: tpu7x:2x2x1
jax: 0.10.0
libtpu: 0.0.40
codegen_flags: <defaults>
</compile_context>

<pallas_src>
import functools

import jax
import jax.numpy as jnp
from jax.experimental import pallas as pl
from jax.experimental.pallas import tpu as pltpu


def _pad8(n):
    return ((n + 7) // 8) * 8


def _titans_kernel(layout, x_ref, slab_ref, out_ref):
    # layout (static Python metadata):
    #   lmm_specs : tuple of (row_off, in_dim, out_dim) for kernel-side LMM layers
    #   (f_off, f_in): fused head weight block (f_in rows, 12 lanes)
    #   b_off     : start row of the bias block
    #               rows b_off + i         : LMM layer-i bias
    #               row  b_off + n_lmm     : fused head bias (12 lanes)
    #               row  b_off + n_lmm + 1 : bp (3 lanes)
    lmm_specs, (f_off, f_in), b_off = layout
    n_lmm = len(lmm_specs)

    # ---- NeuralLongTermMemory MLP (last layer folded into the head on host) ----
    h = x_ref[...]
    for i, (off, din, dout) in enumerate(lmm_specs):
        w = slab_ref[off:off + din, 0:dout]
        b = slab_ref[b_off + i:b_off + i + 1, 0:dout]
        h = jnp.dot(h, w, preferred_element_type=jnp.float32) + b
        h = h * jax.nn.sigmoid(h)                      # SiLU (all non-last layers)

    # ---- fused head: [t | q | k*scale | v@Wp] in one (f_in, 12) matmul ----
    wf = slab_ref[f_off:f_off + f_in, 0:12]
    bf = slab_ref[b_off + n_lmm:b_off + n_lmm + 1, 0:12]
    tqkv = jnp.dot(h, wf, preferred_element_type=jnp.float32) + bf
    t = tqkv[:, 0:3]                                   # out_lmm
    q = tqkv[:, 3:6]
    ks = tqkv[:, 6:9]                                  # k pre-scaled by 1/sqrt(3)
    vp = tqkv[:, 9:12]                                 # v @ Wp (proj folded)

    # ---- EfficientSelfAttention (dim=3, heads=1, sr=1), batch-as-sequence ----
    s = jax.lax.dot_general(
        q, ks, (((1,), (1,)), ((), ())), preferred_element_type=jnp.float32)
    s = s - jnp.max(s, axis=-1, keepdims=True)
    e = jnp.exp(s)
    p = e / jnp.sum(e, axis=-1, keepdims=True)         # exact softmax
    o = jnp.dot(p, vp, preferred_element_type=jnp.float32)

    bp = slab_ref[b_off + n_lmm + 1:b_off + n_lmm + 2, 0:3]
    proj = o + bp

    # ---- single lane-contiguous writeback: [out_lmm | out | pad] ----
    pad = jnp.zeros((t.shape[0], out_ref.shape[1] - 6), jnp.float32)
    out_ref[...] = jnp.concatenate([t, proj, pad], axis=-1).astype(out_ref.dtype)


def prepare_titans_params(params):
    """One-time host-side fusion of all parameters into a single VMEM slab.

    Returns (slab, layout).  Call this at model-init time, NOT per forward.
    """
    lmm = params["lmm"]
    pm = params["pm"]
    P = int(pm.shape[0])

    # Fold persistent memory into layer 0: [pm | x] @ W0 = x @ W0[P:] + pm @ W0[:P].
    W0, b0 = lmm[0]
    lmm_w = [W0[P:, :]] + [W for (W, _) in lmm[1:]]
    lmm_b = [b0 + pm[None, :] @ W0[:P, :]] + [b for (_, b) in lmm[1:]]

    # Fold the last LMM layer (no activation after it) into the fused head.
    W_last, b_last = lmm_w[-1], lmm_b[-1]
    lmm_w, lmm_b = lmm_w[:-1], lmm_b[:-1]

    Wout, bout = params["Wout"], params["bout"]
    A = W_last @ Wout                                   # (head_in, 3)
    a = b_last @ Wout + bout                            # (1, 3)

    Wq, bq = params["Wq"], params["bq"]
    Wk, bk = params["Wk"], params["bk"]
    Wv, bv = params["Wv"], params["bv"]
    Wp, bp = params["Wp"], params["bp"]
    scale = 1.0 / (3.0 ** 0.5)                          # head_dim = dim = 3, heads = 1

    # Columns: [t | q | k*scale | v@Wp] -> kernel needs no score scale / no proj.
    W_fused = jnp.concatenate(
        [A, A @ Wq, (A @ Wk) * scale, A @ (Wv @ Wp)], axis=1)
    b_fused = jnp.concatenate(
        [a, a @ Wq + bq, (a @ Wk + bk) * scale, (a @ Wv + bv) @ Wp], axis=1)

    LANES = 128
    # TODO(synk): slab packing assumes every layer output width <= 128 lanes;
    #             for wider hidden dims fall back to separate weight inputs.
    assert max([int(w.shape[1]) for w in lmm_w] + [12]) <= LANES

    blocks, lmm_specs, off = [], [], 0
    for w in lmm_w:
        din, dout = int(w.shape[0]), int(w.shape[1])
        blk = jnp.zeros((_pad8(din), LANES), jnp.float32)
        blk = blk.at[:din, :dout].set(w.astype(jnp.float32))
        blocks.append(blk)
        lmm_specs.append((off, din, dout))
        off += _pad8(din)

    f_in = int(W_fused.shape[0])
    blk = jnp.zeros((_pad8(f_in), LANES), jnp.float32)
    blk = blk.at[:f_in, :12].set(W_fused.astype(jnp.float32))
    blocks.append(blk)
    f_off = off
    off += _pad8(f_in)

    n_bias = len(lmm_b) + 2
    bblk = jnp.zeros((_pad8(n_bias), LANES), jnp.float32)
    for i, b in enumerate(lmm_b):
        bblk = bblk.at[i, :int(b.shape[1])].set(b[0].astype(jnp.float32))
    bblk = bblk.at[len(lmm_b), :12].set(b_fused[0].astype(jnp.float32))
    bblk = bblk.at[len(lmm_b) + 1, :3].set(bp[0].astype(jnp.float32))
    blocks.append(bblk)
    b_off = off

    slab = jnp.concatenate(blocks, axis=0)              # (rows, 128) f32
    layout = (tuple(lmm_specs), (f_off, f_in), b_off)
    return slab, layout


def make_titans_forward(layout):
    """Builds the jitted forward; `layout` is baked in as static metadata."""
    kernel = functools.partial(_titans_kernel, layout)
    vmem = pl.BlockSpec(memory_space=pltpu.MemorySpace.VMEM)

    @jax.jit
    def forward(x, slab):
        B = x.shape[0]
        merged = pl.pallas_call(
            kernel,
            out_shape=jax.ShapeDtypeStruct((B, 8), jnp.float32),
            in_specs=[vmem, vmem],
            out_specs=vmem,
        )(x.astype(jnp.float32), slab)
        # lanes 0:3 = out_lmm, lanes 3:6 = out
        return merged[:, 3:6], merged[:, 0:3]

    return forward


def _reference_forward(x, params):
    """Pure-JAX reference matching the original (unfused) PyTorch math."""
    B = x.shape[0]
    pm = params["pm"]
    P = pm.shape[0]
    h = jnp.concatenate([jnp.broadcast_to(pm[None, :], (B, P)), x], axis=-1)
    n = len(params["lmm"])
    for i, (W, b) in enumerate(params["lmm"]):
        h = h @ W + b
        if i < n - 1:
            h = jax.nn.silu(h)
    t = h @ params["Wout"] + params["bout"]
    q = t @ params["Wq"] + params["bq"]
    k = t @ params["Wk"] + params["bk"]
    v = t @ params["Wv"] + params["bv"]
    s = (q @ k.T) * (1.0 / jnp.sqrt(jnp.float32(3.0)))
    p = jax.nn.softmax(s, axis=-1)
    o = p @ v
    o = o @ params["Wp"] + params["bp"]
    return o, t


def _init_linear(key, d_in, d_out):
    kw, kb = jax.random.split(key)
    bound = 1.0 / jnp.sqrt(jnp.float32(d_in))
    W = jax.random.uniform(kw, (d_in, d_out), jnp.float32, -bound, bound)
    b = jax.random.uniform(kb, (1, d_out), jnp.float32, -bound, bound)
    return W, b


def make_params(key, d_model, hidden_dim, lmm_layers, persistent_slots):
    D = d_model + persistent_slots
    keys = jax.random.split(key, lmm_layers + 8)

    # NeuralLongTermMemory: D -> hidden -> ... -> D
    lmm = []
    in_dim = D
    for i in range(lmm_layers):
        out_dim = hidden_dim if i < lmm_layers - 1 else D
        lmm.append(_init_linear(keys[i], in_dim, out_dim))
        in_dim = out_dim

    Wout, bout = _init_linear(keys[lmm_layers + 0], D, 3)
    Wq, bq = _init_linear(keys[lmm_layers + 1], 3, 3)
    Wk, bk = _init_linear(keys[lmm_layers + 2], 3, 3)
    Wv, bv = _init_linear(keys[lmm_layers + 3], 3, 3)
    Wp, bp = _init_linear(keys[lmm_layers + 4], 3, 3)
    pm = jax.random.normal(keys[lmm_layers + 5], (persistent_slots,), jnp.float32)

    return {
        "lmm": lmm,
        "Wout": Wout, "bout": bout,
        "Wq": Wq, "bq": bq,
        "Wk": Wk, "bk": bk,
        "Wv": Wv, "bv": bv,
        "Wp": Wp, "bp": bp,
        "pm": pm,
    }


if __name__ == "__main__":
    # Small shapes consistent with the module's forward:
    #   x: (B, d_model) -> unsqueeze(0) -> (1, B, d_model) in the PyTorch code.
    B, d_model, hidden_dim, lmm_layers, persistent_slots = 8, 32, 32, 2, 4

    key = jax.random.PRNGKey(0)
    k_params, k_x = jax.random.split(key)
    params = make_params(k_params, d_model, hidden_dim, lmm_layers, persistent_slots)
    x = jax.random.normal(k_x, (B, d_model), jnp.float32)

    # One-time host-side parameter fusion, kept out of the per-call hot path.
    slab, layout = prepare_titans_params(params)
    slab = jax.block_until_ready(slab)
    forward = make_titans_forward(layout)

    out, out_lmm = forward(x, slab)
    jax.block_until_ready((out, out_lmm))
    assert out.shape == (B, 3) and out_lmm.shape == (B, 3)

    # Correctness vs the unfused pure-JAX reference.  Exact softmax divide lets
    # the tolerance tighten vs v2; remaining slack covers MXU f32 rounding and
    # host-side weight-fusion reassociation.
    ref_out, ref_lmm = _reference_forward(x, params)
    assert bool(jnp.allclose(out_lmm, ref_lmm, atol=1e-3, rtol=1e-3))
    assert bool(jnp.allclose(out, ref_out, atol=1e-3, rtol=1e-3))

    print("KERNEL_OK")
</pallas_src>

<mosaic_0001>
module attributes {stable_mosaic.version = 11 : i64} {
  func.func @_titans_kernel(%arg0: memref<8x32xf32, #tpu.memory_space<vmem>>, %arg1: memref<72x128xf32, #tpu.memory_space<vmem>>, %arg2: memref<8x8xf32, #tpu.memory_space<vmem>>) attributes {dimension_semantics = [], scalar_prefetch = 0 : i64, scratch_operands = 0 : i64, tpu.core_type = #tpu.core_type<tc>} {
    %c0 = arith.constant 0 : index
    %c0_0 = arith.constant 0 : index
    %0 = vector.load %arg0[%c0, %c0_0] : memref<8x32xf32, #tpu.memory_space<vmem>>, vector<8x32xf32>
    %c0_1 = arith.constant 0 : index
    %c0_2 = arith.constant 0 : index
    %1 = vector.load %arg1[%c0_1, %c0_2] : memref<72x128xf32, #tpu.memory_space<vmem>>, vector<32x32xf32>
    %c64 = arith.constant 64 : index
    %c0_3 = arith.constant 0 : index
    %2 = vector.load %arg1[%c64, %c0_3] : memref<72x128xf32, #tpu.memory_space<vmem>>, vector<1x32xf32>
    %cst = arith.constant dense<0.000000e+00> : vector<8x32xf32>
    %3 = tpu.matmul %0, %1, %cst {dimension_numbers = #tpu.dot_dimension_numbers<[1], [0], [0], [1], [0, 0, 1, 1], [], []>} : vector<8x32xf32>, vector<32x32xf32>, vector<8x32xf32> -> vector<8x32xf32>
    %4 = vector.broadcast %2 : vector<1x32xf32> to vector<8x32xf32>
    %5 = arith.addf %3, %4 : vector<8x32xf32>
    %6 = arith.negf %5 : vector<8x32xf32>
    %7 = math.exp %6 : vector<8x32xf32>
    %cst_4 = arith.constant 1.000000e+00 : f32
    %8 = vector.broadcast %cst_4 : f32 to vector<8x32xf32>
    %9 = arith.addf %8, %7 : vector<8x32xf32>
    %10 = arith.divf %8, %9 : vector<8x32xf32>
    %11 = arith.mulf %5, %10 : vector<8x32xf32>
    %c32 = arith.constant 32 : index
    %c0_5 = arith.constant 0 : index
    %12 = vector.load %arg1[%c32, %c0_5] : memref<72x128xf32, #tpu.memory_space<vmem>>, vector<32x12xf32>
    %c65 = arith.constant 65 : index
    %c0_6 = arith.constant 0 : index
    %13 = vector.load %arg1[%c65, %c0_6] : memref<72x128xf32, #tpu.memory_space<vmem>>, vector<1x12xf32>
    %cst_7 = arith.constant dense<0.000000e+00> : vector<8x12xf32>
    %14 = tpu.matmul %11, %12, %cst_7 {dimension_numbers = #tpu.dot_dimension_numbers<[1], [0], [0], [1], [0, 0, 1, 1], [], []>} : vector<8x32xf32>, vector<32x12xf32>, vector<8x12xf32> -> vector<8x12xf32>
    %15 = vector.broadcast %13 : vector<1x12xf32> to vector<8x12xf32>
    %16 = arith.addf %14, %15 : vector<8x12xf32>
    %17 = vector.extract_strided_slice %16 {offsets = [0, 0], sizes = [8, 3], strides = [1, 1]} : vector<8x12xf32> to vector<8x3xf32>
    %18 = vector.extract_strided_slice %16 {offsets = [0, 3], sizes = [8, 3], strides = [1, 1]} : vector<8x12xf32> to vector<8x3xf32>
    %19 = vector.extract_strided_slice %16 {offsets = [0, 6], sizes = [8, 3], strides = [1, 1]} : vector<8x12xf32> to vector<8x3xf32>
    %20 = vector.extract_strided_slice %16 {offsets = [0, 9], sizes = [8, 3], strides = [1, 1]} : vector<8x12xf32> to vector<8x3xf32>
    %cst_8 = arith.constant dense<0.000000e+00> : vector<8x8xf32>
    %21 = tpu.matmul %18, %19, %cst_8 {dimension_numbers = #tpu.dot_dimension_numbers<[1], [1], [0], [0], [0, 0, 1, 0], [], []>} : vector<8x3xf32>, vector<8x3xf32>, vector<8x8xf32> -> vector<8x8xf32>
    %cst_9 = arith.constant dense<0xFF800000> : vector<8xf32>
    %22 = vector.multi_reduction <maximumf>, %21, %cst_9 [1] : vector<8x8xf32> to vector<8xf32>
    %23 = vector.shape_cast %22 : vector<8xf32> to vector<8x1xf32>
    %24 = vector.broadcast %23 : vector<8x1xf32> to vector<8x8xf32>
    %25 = arith.subf %21, %24 : vector<8x8xf32>
    %26 = math.exp %25 : vector<8x8xf32>
    %cst_10 = arith.constant dense<0.000000e+00> : vector<8xf32>
    %27 = vector.multi_reduction <add>, %26, %cst_10 [1] : vector<8x8xf32> to vector<8xf32>
    %28 = vector.shape_cast %27 : vector<8xf32> to vector<8x1xf32>
    %29 = vector.broadcast %28 : vector<8x1xf32> to vector<8x8xf32>
    %30 = arith.divf %26, %29 : vector<8x8xf32>
    %cst_11 = arith.constant dense<0.000000e+00> : vector<8x3xf32>
    %31 = tpu.matmul %30, %20, %cst_11 {dimension_numbers = #tpu.dot_dimension_numbers<[1], [0], [0], [1], [0, 0, 1, 1], [], []>} : vector<8x8xf32>, vector<8x3xf32>, vector<8x3xf32> -> vector<8x3xf32>
    %c66 = arith.constant 66 : index
    %c0_12 = arith.constant 0 : index
    %32 = vector.load %arg1[%c66, %c0_12] : memref<72x128xf32, #tpu.memory_space<vmem>>, vector<1x3xf32>
    %33 = vector.broadcast %32 : vector<1x3xf32> to vector<8x3xf32>
    %34 = arith.addf %31, %33 : vector<8x3xf32>
    %cst_13 = arith.constant 0.000000e+00 : f32
    %35 = vector.broadcast %cst_13 : f32 to vector<8x2xf32>
    %36 = tpu.concatenate %17, %34, %35 in 1 : vector<8x3xf32>, vector<8x3xf32>, vector<8x2xf32> -> vector<8x8xf32>
    %c0_14 = arith.constant 0 : index
    %c0_15 = arith.constant 0 : index
    %37 = vector.load %arg2[%c0_14, %c0_15] : memref<8x8xf32, #tpu.memory_space<vmem>>, vector<8x8xf32>
    tpu.vector_store %arg2[%c0_14, %c0_15], %36 {strides = array<i32>} : memref<8x8xf32, #tpu.memory_space<vmem>>, vector<8x8xf32>,
    return
  }
}

</mosaic_0001>

<llo_original>
// kernel: forward.1
$region0: #{forward.1}
  #allocation0 [shape = 'u32[]', space=smem, size = 0x4, offset = 0x4, fixed_abs, tag = 'smem constant byte address 0x4 - core index']
  #allocation1 [shape = 'u32[144,128]{1,0:T(1,128)}', space=vmem, size = 0x12000, scoped, tag = 'internal scratch']
  %s0 = inlined_call_operand.hbm [shape: f32[8,32], index: 0, kind: input, shape index: {}]
  %s1 = inlined_call_operand.hbm [shape: f32[72,128], index: 1, kind: input, shape index: {}]
  %s2 = inlined_call_operand.vmem [shape: f32[8,8], index: 2, kind: output, shape index: {}]
  %s3 = sld [smem:[#allocation0]]
  $region26: #{forward.1} parent=0
    _
  %s5 = ssub.s32 1, %s3
  %s6 = scalar_select 0, %s5, %s3
  $region1: #{forward.1} parent=0
    #allocation2 [shape = 'u8[4096]{0}', space=vmem, size = 0x1000, scoped, tag = 'input window, operand 0, single buffered']
    #allocation3 [shape = 's32[1]{0}', space=sflag, size = 0x4, scoped, tag = 'scoped memory for forward.1']
    #allocation4 [shape = 'u8[36864]{0}', space=vmem, size = 0x9000, scoped, tag = 'input window, operand 1, single buffered']
    #allocation5 [shape = 's32[1]{0}', space=sflag, size = 0x4, scoped, tag = 'scoped memory for forward.1']
    %7 = vsyncpa [#allocation3], 0
    %8 = vsyncpa [#allocation5], 0
    // Predicated region
    $region2: #{forward.1} parent=1 // pred_check
      _
    $region3: #{forward.1} parent=1 // pred_check_branch
      %10 = sbr.rel (0) target = $region5
    $region4: #{forward.1} parent=1 // pred_region
      %s12 = ssub.s32 128, 128
      %13 = vsyncadd [#allocation3], %s12
      %s15 = sshll.u32 [#allocation2], 4
      %s16 = int_to_ptr.vmem [resolvable:$true] %s15
      %18 = dma.hbm_to_vmem [thread:$0]  %s0, 128, %s16, [#allocation3]
    $region5: #{forward.1} parent=1 // pred_fallthru
      _
    // Predicated region
    $region6: #{forward.1} parent=1 // pred_check
      _
    $region7: #{forward.1} parent=1 // pred_check_branch
      %20 = sbr.rel (0) target = $region9
    $region8: #{forward.1} parent=1 // pred_region
      %s22 = ssub.s32 1152, 1152
      %23 = vsyncadd [#allocation5], %s22
      %s24 = sshll.u32 [#allocation4], 4
      %s25 = int_to_ptr.vmem [resolvable:$true] %s24
      %30 = dma.hbm_to_vmem [thread:$0]  %s1, 1152, %s25, [#allocation5], 128, 128, 8
    $region9: #{forward.1} parent=1 // pred_fallthru
      _
    // Predicated region
    $region10: #{forward.1} parent=1 // pred_check
      _
    $region11: #{forward.1} parent=1 // pred_check_branch
      %32 = sbr.rel (0) target = $region13
    $region12: #{forward.1} parent=1 // pred_region
      %33 = dma.done [#allocation3], 128
    $region13: #{forward.1} parent=1 // pred_fallthru
      _
    // Predicated region
    $region14: #{forward.1} parent=1 // pred_check
      _
    $region15: #{forward.1} parent=1 // pred_check_branch
      %35 = sbr.rel (0) target = $region17
    $region16: #{forward.1} parent=1 // pred_region
      %36 = dma.done [#allocation5], 1152
    $region17: #{forward.1} parent=1 // pred_fallthru
      _
    %v37 = vld [vmem:[#allocation2] sm:$0xff]
    %v38 = vld [vmem:[#allocation4] sm:$0xff]
    %v39 = vld [vmem:[#allocation4 + $0x8] sm:$0xff]
    %v40 = vld [vmem:[#allocation4 + $0x10] sm:$0xff]
    %v41 = vld [vmem:[#allocation4 + $0x18] sm:$0xff]
    %v42 = vld [vmem:[#allocation4 + $0x40] sm:$0x1]
    %v43 = vlaneseq
    %v44 = vshrl.u32 %v43, 7
    %v45 = vsub.s32 0, %v44
    %v46 = vrot.slane %v42, %v45
    %vm47 = vcmask 261120
    %v49 = vsel %vm47, %v37, 0
    %51 = vmatprep.subr.mxu0 0.0
    %52 = vmatpush1.msra.mxu0 %v38
    %53 = vmatprep.subr.mxu0 0.0
    %54 = vmatpush1.msra.mxu0 %v39
    %55 = vmatprep.subr.mxu0 0.0
    %56 = vmatpush1.msra.mxu0 %v40
    %57 = vmatprep.subr.mxu0 0.0
    %58 = vmatpush1.msra.mxu0 %v41
    %59 = vmatprep.subr.mxu0 0.0
    %60 = vmatpush1.msra.mxu0 0.0
    %61 = vmatprep.subr.mxu0 0.0
    %62 = vmatpush1.msra.mxu0 0.0
    %63 = vmatprep.subr.mxu0 0.0
    %64 = vmatpush1.msra.mxu0 0.0
    %65 = vmatprep.subr.mxu0 0.0
    %66 = vmatpush1.msra.mxu0 0.0
    %67 = vmatprep.subr.mxu0 0.0
    %68 = vmatpush1.msra.mxu0 0.0
    %69 = vmatprep.subr.mxu0 0.0
    %70 = vmatpush1.msra.mxu0 0.0
    %71 = vmatprep.subr.mxu0 0.0
    %72 = vmatpush1.msra.mxu0 0.0
    %73 = vmatprep.subr.mxu0 0.0
    %74 = vmatpush1.msra.mxu0 0.0
    %75 = vmatprep.subr.mxu0 0.0
    %76 = vmatpush1.msra.mxu0 0.0
    %77 = vmatprep.subr.mxu0 0.0
    %78 = vmatpush1.msra.mxu0 0.0
    %79 = vmatprep.subr.mxu0 0.0
    %80 = vmatpush1.msra.mxu0 0.0
    %81 = vmatprep.subr.mxu0 0.0
    %82 = vmatpush1.msra.mxu0 0.0
    %83 = vmatprep.subr.mxu0 0.0
    %84 = vmatpush1.msra.mxu0 0.0
    %85 = vmatprep.subr.mxu0 0.0
    %86 = vmatpush1.msra.mxu0 0.0
    %87 = vmatprep.subr.mxu0 0.0
    %88 = vmatpush1.msra.mxu0 0.0
    %89 = vmatprep.subr.mxu0 0.0
    %90 = vmatpush1.msra.mxu0 0.0
    %91 = vmatprep.subr.mxu0 0.0
    %92 = vmatpush1.msra.mxu0 0.0
    %93 = vmatprep.subr.mxu0 0.0
    %94 = vmatpush1.msra.mxu0 0.0
    %95 = vmatprep.subr.mxu0 0.0
    %96 = vmatpush1.msra.mxu0 0.0
    %97 = vmatprep.subr.mxu0 0.0
    %98 = vmatpush1.msra.mxu0 0.0
    %99 = vmatprep.subr.mxu0 0.0
    %100 = vmatpush1.msra.mxu0 0.0
    %101 = vmatprep.subr.mxu0 0.0
    %102 = vmatpush1.msra.mxu0 0.0
    %103 = vmatprep.subr.mxu0 0.0
    %104 = vmatpush1.msra.mxu0 0.0
    %105 = vmatprep.subr.mxu0 0.0
    %106 = vmatpush1.msra.mxu0 0.0
    %107 = vmatprep.subr.mxu0 0.0
    %108 = vmatpush1.msra.mxu0 0.0
    %109 = vmatprep.subr.mxu0 0.0
    %110 = vmatpush1.msra.mxu0 0.0
    %111 = vmatprep.subr.mxu0 0.0
    %112 = vmatpush1.msra.mxu0 0.0
    %113 = vmatprep.subr.mxu0 0.0
    %114 = vmatpush1.msra.mxu0 0.0
    %115 = vmatprep.mubr.f32.mxu0 0.0
    %116 = vmatmul.mubr.f32.gmra.mrb[0].mxu0 %v49
    %v117 = vpop.f32.mrb[0].mxu0
    %v118 = vadd.f32 %v46, %v117
    %v119 = vpop.f32.mrb[0].mxu0
    %120 = vdwg.mxu0
    %v121 = vxor.u32 %v118, 2147483648
    %v122 = vmul.f32 %v121, 1.442695
    %v123 = vpow.pop %v122
    %v124 = vadd.f32 %v123, 1.0
    %v125 = vrcp.pop %v124
    %v126 = vmul.f32 1.0, %v125
    %v127 = vmul.f32 %v118, %v126
    %v128 = vld [vmem:[#allocation4 + $0x20] sm:$0xff]
    %v129 = vld [vmem:[#allocation4 + $0x28] sm:$0xff]
    %v130 = vld [vmem:[#allocation4 + $0x30] sm:$0xff]
    %v131 = vld [vmem:[#allocation4 + $0x38] sm:$0xff]
    %v132 = vld [vmem:[#allocation4 + $0x41] sm:$0x1]
    %v133 = vlaneseq
    %v134 = vshrl.u32 %v133, 7
    %v135 = vsub.s32 0, %v134
    %v136 = vrot.slane %v132, %v135
    %v138 = vsel %vm47, %v127, 0
    %140 = vmatprep.subr.mxu0 0.0
    %141 = vmatpush1.msra.mxu0 %v128
    %142 = vmatprep.subr.mxu0 0.0
    %143 = vmatpush1.msra.mxu0 %v129
    %144 = vmatprep.subr.mxu0 0.0
    %145 = vmatpush1.msra.mxu0 %v130
    %146 = vmatprep.subr.mxu0 0.0
    %147 = vmatpush1.msra.mxu0 %v131
    %148 = vmatprep.subr.mxu0 0.0
    %149 = vmatpush1.msra.mxu0 0.0
    %150 = vmatprep.subr.mxu0 0.0
    %151 = vmatpush1.msra.mxu0 0.0
    %152 = vmatprep.subr.mxu0 0.0
    %153 = vmatpush1.msra.mxu0 0.0
    %154 = vmatprep.subr.mxu0 0.0
    %155 = vmatpush1.msra.mxu0 0.0
    %156 = vmatprep.subr.mxu0 0.0
    %157 = vmatpush1.msra.mxu0 0.0
    %158 = vmatprep.subr.mxu0 0.0
    %159 = vmatpush1.msra.mxu0 0.0
    %160 = vmatprep.subr.mxu0 0.0
    %161 = vmatpush1.msra.mxu0 0.0
    %162 = vmatprep.subr.mxu0 0.0
    %163 = vmatpush1.msra.mxu0 0.0
    %164 = vmatprep.subr.mxu0 0.0
    %165 = vmatpush1.msra.mxu0 0.0
    %166 = vmatprep.subr.mxu0 0.0
    %167 = vmatpush1.msra.mxu0 0.0
    %168 = vmatprep.subr.mxu0 0.0
    %169 = vmatpush1.msra.mxu0 0.0
    %170 = vmatprep.subr.mxu0 0.0
    %171 = vmatpush1.msra.mxu0 0.0
    %172 = vmatprep.subr.mxu0 0.0
    %173 = vmatpush1.msra.mxu0 0.0
    %174 = vmatprep.subr.mxu0 0.0
    %175 = vmatpush1.msra.mxu0 0.0
    %176 = vmatprep.subr.mxu0 0.0
    %177 = vmatpush1.msra.mxu0 0.0
    %178 = vmatprep.subr.mxu0 0.0
    %179 = vmatpush1.msra.mxu0 0.0
    %180 = vmatprep.subr.mxu0 0.0
    %181 = vmatpush1.msra.mxu0 0.0
    %182 = vmatprep.subr.mxu0 0.0
    %183 = vmatpush1.msra.mxu0 0.0
    %184 = vmatprep.subr.mxu0 0.0
    %185 = vmatpush1.msra.mxu0 0.0
    %186 = vmatprep.subr.mxu0 0.0
    %187 = vmatpush1.msra.mxu0 0.0
    %188 = vmatprep.subr.mxu0 0.0
    %189 = vmatpush1.msra.mxu0 0.0
    %190 = vmatprep.subr.mxu0 0.0
    %191 = vmatpush1.msra.mxu0 0.0
    %192 = vmatprep.subr.mxu0 0.0
    %193 = vmatpush1.msra.mxu0 0.0
    %194 = vmatprep.subr.mxu0 0.0
    %195 = vmatpush1.msra.mxu0 0.0
    %196 = vmatprep.subr.mxu0 0.0
    %197 = vmatpush1.msra.mxu0 0.0
    %198 = vmatprep.subr.mxu0 0.0
    %199 = vmatpush1.msra.mxu0 0.0
    %200 = vmatprep.subr.mxu0 0.0
    %201 = vmatpush1.msra.mxu0 0.0
    %202 = vmatprep.subr.mxu0 0.0
    %203 = vmatpush1.msra.mxu0 0.0
    %204 = vmatprep.mubr.f32.mxu0 0.0
    %205 = vmatmul.mubr.f32.gmra.mrb[0].mxu0 %v138
    %v206 = vpop.f32.mrb[0].mxu0
    %v207 = vadd.f32 %v136, %v206
    %v208 = vpop.f32.mrb[0].mxu0
    %209 = vdwg.mxu0
    %211 = vrot.lane.b32.xlu0 %v207, 125
    %v212 = vpop.permute.xlu0 %211
    %213 = vrot.lane.b32.xlu0 %v207, 122
    %v214 = vpop.permute.xlu0 %213
    %vm215 = vcmask 23552
    %v216 = vsel %vm215, %v212, 0
    %v218 = vsel %vm215, %v214, 0
    %220 = vmatprep.subr.mxu0 0.0
    %221 = vmatpush1.xpose.msra.mxu0 %v218
    %222 = vmatprep.subr.mxu0 0.0
    %223 = vmatpush1.xpose.msra.mxu0 0.0
    %224 = vmatprep.subr.mxu0 0.0
    %225 = vmatpush1.xpose.msra.mxu0 0.0
    %226 = vmatprep.subr.mxu0 0.0
    %227 = vmatpush1.xpose.msra.mxu0 0.0
    %228 = vmatprep.subr.mxu0 0.0
    %229 = vmatpush1.xpose.msra.mxu0 0.0
    %230 = vmatprep.subr.mxu0 0.0
    %231 = vmatpush1.xpose.msra.mxu0 0.0
    %232 = vmatprep.subr.mxu0 0.0
    %233 = vmatpush1.xpose.msra.mxu0 0.0
    %234 = vmatprep.subr.mxu0 0.0
    %235 = vmatpush1.xpose.msra.mxu0 0.0
    %236 = vmatprep.subr.mxu0 0.0
    %237 = vmatpush1.xpose.msra.mxu0 0.0
    %238 = vmatprep.subr.mxu0 0.0
    %239 = vmatpush1.xpose.msra.mxu0 0.0
    %240 = vmatprep.subr.mxu0 0.0
    %241 = vmatpush1.xpose.msra.mxu0 0.0
    %242 = vmatprep.subr.mxu0 0.0
    %243 = vmatpush1.xpose.msra.mxu0 0.0
    %244 = vmatprep.subr.mxu0 0.0
    %245 = vmatpush1.xpose.msra.mxu0 0.0
    %246 = vmatprep.subr.mxu0 0.0
    %247 = vmatpush1.xpose.msra.mxu0 0.0
    %248 = vmatprep.subr.mxu0 0.0
    %249 = vmatpush1.xpose.msra.mxu0 0.0
    %250 = vmatprep.subr.mxu0 0.0
    %251 = vmatpush1.xpose.msra.mxu0 0.0
    %252 = vmatprep.subr.mxu0 0.0
    %253 = vmatpush1.xpose.msra.mxu0 0.0
    %254 = vmatprep.subr.mxu0 0.0
    %255 = vmatpush1.xpose.msra.mxu0 0.0
    %256 = vmatprep.subr.mxu0 0.0
    %257 = vmatpush1.xpose.msra.mxu0 0.0
    %258 = vmatprep.subr.mxu0 0.0
    %259 = vmatpush1.xpose.msra.mxu0 0.0
    %260 = vmatprep.subr.mxu0 0.0
    %261 = vmatpush1.xpose.msra.mxu0 0.0
    %262 = vmatprep.subr.mxu0 0.0
    %263 = vmatpush1.xpose.msra.mxu0 0.0
    %264 = vmatprep.subr.mxu0 0.0
    %265 = vmatpush1.xpose.msra.mxu0 0.0
    %266 = vmatprep.subr.mxu0 0.0
    %267 = vmatpush1.xpose.msra.mxu0 0.0
    %268 = vmatprep.subr.mxu0 0.0
    %269 = vmatpush1.xpose.msra.mxu0 0.0
    %270 = vmatprep.subr.mxu0 0.0
    %271 = vmatpush1.xpose.msra.mxu0 0.0
    %272 = vmatprep.subr.mxu0 0.0
    %273 = vmatpush1.xpose.msra.mxu0 0.0
    %274 = vmatprep.subr.mxu0 0.0
    %275 = vmatpush1.xpose.msra.mxu0 0.0
    %276 = vmatprep.subr.mxu0 0.0
    %277 = vmatpush1.xpose.msra.mxu0 0.0
    %278 = vmatprep.subr.mxu0 0.0
    %279 = vmatpush1.xpose.msra.mxu0 0.0
    %280 = vmatprep.subr.mxu0 0.0
    %281 = vmatpush1.xpose.msra.mxu0 0.0
    %282 = vmatprep.subr.mxu0 0.0
    %283 = vmatpush1.xpose.msra.mxu0 0.0
    %284 = vmatprep.mubr.f32.mxu0 0.0
    %285 = vmatmul.mubr.f32.gmra.mrb[0].mxu0 %v216
    %v286 = vpop.f32.mrb[0].mxu0
    %v287 = vadd.f32 0.0, %v286
    %v288 = vpop.f32.mrb[0].mxu0
    %289 = vdwg.mxu0
    %vm290 = vcmask 64512
    %v291 = vsel %vm290, %v287, -inf
    %292 = vmax.xlane.f32.xlu0 %v291
    %v293 = vpop.xlane.xlu0 %292
    %v294 = vsub.f32 %v287, %v293
    %v295 = vmul.f32 %v294, 1.442695
    %v296 = vpow.pop %v295
    %v297 = vsel %vm290, %v296, 0.0
    %298 = vadd.xlane.f32.xlu0 %v297
    %v299 = vpop.xlane.xlu0 %298
    %v300 = vrcp.pop %v299
    %v301 = vmul.f32 %v296, %v300
    %v302 = vld [vmem:[#allocation4 + $0x42] sm:$0x1]
    %v303 = vlaneseq
    %v304 = vshrl.u32 %v303, 7
    %v305 = vsub.s32 0, %v304
    %v306 = vrot.slane %v302, %v305
    %307 = vrot.lane.b32.xlu0 %v207, 119
    %v308 = vpop.permute.xlu0 %307
    %v311 = vsel %vm290, %v301, 0
    %313 = vmatprep.subr.mxu0 0.0
    %314 = vmatpush1.msra.mxu0 %v308
    %315 = vmatprep.subr.mxu0 0.0
    %316 = vmatpush1.msra.mxu0 0.0
    %317 = vmatprep.subr.mxu0 0.0
    %318 = vmatpush1.msra.mxu0 0.0
    %319 = vmatprep.subr.mxu0 0.0
    %320 = vmatpush1.msra.mxu0 0.0
    %321 = vmatprep.subr.mxu0 0.0
    %322 = vmatpush1.msra.mxu0 0.0
    %323 = vmatprep.subr.mxu0 0.0
    %324 = vmatpush1.msra.mxu0 0.0
    %325 = vmatprep.subr.mxu0 0.0
    %326 = vmatpush1.msra.mxu0 0.0
    %327 = vmatprep.subr.mxu0 0.0
    %328 = vmatpush1.msra.mxu0 0.0
    %329 = vmatprep.subr.mxu0 0.0
    %330 = vmatpush1.msra.mxu0 0.0
    %331 = vmatprep.subr.mxu0 0.0
    %332 = vmatpush1.msra.mxu0 0.0
    %333 = vmatprep.subr.mxu0 0.0
    %334 = vmatpush1.msra.mxu0 0.0
    %335 = vmatprep.subr.mxu0 0.0
    %336 = vmatpush1.msra.mxu0 0.0
    %337 = vmatprep.subr.mxu0 0.0
    %338 = vmatpush1.msra.mxu0 0.0
    %339 = vmatprep.subr.mxu0 0.0
    %340 = vmatpush1.msra.mxu0 0.0
    %341 = vmatprep.subr.mxu0 0.0
    %342 = vmatpush1.msra.mxu0 0.0
    %343 = vmatprep.subr.mxu0 0.0
    %344 = vmatpush1.msra.mxu0 0.0
    %345 = vmatprep.subr.mxu0 0.0
    %346 = vmatpush1.msra.mxu0 0.0
    %347 = vmatprep.subr.mxu0 0.0
    %348 = vmatpush1.msra.mxu0 0.0
    %349 = vmatprep.subr.mxu0 0.0
    %350 = vmatpush1.msra.mxu0 0.0
    %351 = vmatprep.subr.mxu0 0.0
    %352 = vmatpush1.msra.mxu0 0.0
    %353 = vmatprep.subr.mxu0 0.0
    %354 = vmatpush1.msra.mxu0 0.0
    %355 = vmatprep.subr.mxu0 0.0
    %356 = vmatpush1.msra.mxu0 0.0
    %357 = vmatprep.subr.mxu0 0.0
    %358 = vmatpush1.msra.mxu0 0.0
    %359 = vmatprep.subr.mxu0 0.0
    %360 = vmatpush1.msra.mxu0 0.0
    %361 = vmatprep.subr.mxu0 0.0
    %362 = vmatpush1.msra.mxu0 0.0
    %363 = vmatprep.subr.mxu0 0.0
    %364 = vmatpush1.msra.mxu0 0.0
    %365 = vmatprep.subr.mxu0 0.0
    %366 = vmatpush1.msra.mxu0 0.0
    %367 = vmatprep.subr.mxu0 0.0
    %368 = vmatpush1.msra.mxu0 0.0
    %369 = vmatprep.subr.mxu0 0.0
    %370 = vmatpush1.msra.mxu0 0.0
    %371 = vmatprep.subr.mxu0 0.0
    %372 = vmatpush1.msra.mxu0 0.0
    %373 = vmatprep.subr.mxu0 0.0
    %374 = vmatpush1.msra.mxu0 0.0
    %375 = vmatprep.subr.mxu0 0.0
    %376 = vmatpush1.msra.mxu0 0.0
    %377 = vmatprep.mubr.f32.mxu0 0.0
    %378 = vmatmul.mubr.f32.gmra.mrb[0].mxu0 %v311
    %v379 = vpop.f32.mrb[0].mxu0
    %v380 = vadd.f32 %v306, %v379
    %v381 = vpop.f32.mrb[0].mxu0
    %382 = vdwg.mxu0
    %384 = vrot.lane.b32.xlu0 %v380, 3
    %v385 = vpop.permute.xlu0 %384
    %v387 = vsel %vm215, %v207, %v385
    %vm388 = vcmask 48128
    %v389 = vsel %vm388, %v387, 0.0
    %390 = vst.msk [vmem:[%s2] sm:$0xff] %vm290, %v389
    // Predicated region
    $region18: #{forward.1} parent=1 // pred_check
      _
    $region19: #{forward.1} parent=1 // pred_check_branch
      %392 = sbr.rel (0) target = $region21
    $region20: #{forward.1} parent=1 // pred_region
      _
    $region21: #{forward.1} parent=1 // pred_fallthru
      _
    // Predicated region
    $region22: #{forward.1} parent=1 // pred_check
      _
    $region23: #{forward.1} parent=1 // pred_check_branch
      %394 = sbr.rel (0) target = $region25
    $region24: #{forward.1} parent=1 // pred_region
      _
    $region25: #{forward.1} parent=1 // pred_fallthru
      _
    %395 = vsyncpa [#allocation3], 1
    %396 = vsyncpa [#allocation5], 1

</llo_original>
